<compile_context>
chip_gen: v7x
topology: tpu7x:2x2x1
jax: 0.10.0
libtpu: 0.0.40
codegen_flags: <defaults>
</compile_context>

<pallas_src>
import functools

import numpy as np
import jax
import jax.numpy as jnp
from jax.experimental import pallas as pl
from jax.experimental.pallas import tpu as pltpu

_SQRT_2_OVER_PI = float(np.sqrt(2.0 / np.pi))


def _gelu_tanh(x):
    # GELU(approximate='tanh'), computed in f32.
    return 0.5 * x * (1.0 + jnp.tanh(_SQRT_2_OVER_PI * (x + 0.044715 * x * x * x)))


def _row_tile(n, target=256):
    """Largest divisor of n that is a multiple of 8 and <= target (else n)."""
    if n <= target:
        return n
    t = (target // 8) * 8
    while t >= 8:
        if n % t == 0:
            return t
        t -= 8
    return n


def _group_tile(n_groups, rows_per_group, target_rows=256):
    """How many whole groups to batch per grid step (divisor of n_groups)."""
    if rows_per_group >= target_rows:
        return 1
    gb = max(1, min(n_groups, target_rows // rows_per_group))
    while gb > 1 and n_groups % gb:
        gb -= 1
    return gb


def _est_vmem(*blocks):
    """Rough double-buffered VMEM working-set estimate for (shape, dtype) blocks."""
    total = 0
    for shape, dtype in blocks:
        total += 2 * int(np.prod(shape)) * jnp.dtype(dtype).itemsize
    return total


def _compiler_params(dimension_semantics, vmem_bytes=0):
    kwargs = dict(dimension_semantics=dimension_semantics)
    # Only raise the scoped-VMEM limit when clearly needed (production shapes);
    # small/test shapes never touch it, and we stay well under any generation's
    # physical VMEM.
    if vmem_bytes > 24 * 1024 * 1024:
        kwargs["vmem_limit_bytes"] = int(min(vmem_bytes + (8 << 20), 100 * 1024 * 1024))
    return pltpu.CompilerParams(**kwargs)


# ----------------------------------------------------------------------------
# Kernel 1: fused LayerNorm(affine=False) + t2i_modulate prologue + matmul+bias
#   out[b, i, :] = (LN(x[b, i]) * (1 + scale[b]) + shift[b]) @ W + bias
# Weight is VMEM-resident (constant index map) -> fetched once per call.
# ----------------------------------------------------------------------------
def _ln_mod_matmul_kernel(x_ref, shift_ref, scale_ref, w_ref, b_ref, o_ref, *, eps):
    x = x_ref[0].astype(jnp.float32)                      # (TN, C)
    mu = jnp.mean(x, axis=-1, keepdims=True)
    xc = x - mu
    var = jnp.mean(xc * xc, axis=-1, keepdims=True)
    xn = xc * jax.lax.rsqrt(var + eps)
    shift = shift_ref[0].astype(jnp.float32)              # (1, C)
    scale = scale_ref[0].astype(jnp.float32)               # (1, C)
    xm = (xn * (1.0 + scale) + shift).astype(x_ref.dtype)
    y = jnp.dot(xm, w_ref[...], preferred_element_type=jnp.float32)
    y = y + b_ref[...].astype(jnp.float32)
    o_ref[0] = y.astype(o_ref.dtype)


def ln_mod_matmul(x, shift, scale, w, b, *, eps=1e-6, row_target=256):
    B, N, C = x.shape
    Cin, Cout = w.shape
    assert Cin == C
    TN = _row_tile(N, row_target)
    grid = (B, N // TN)
    est = _est_vmem(((TN, C), x.dtype), ((C, Cout), w.dtype),
                    ((TN, Cout), x.dtype), ((TN, Cout), jnp.float32))
    return pl.pallas_call(
        functools.partial(_ln_mod_matmul_kernel, eps=eps),
        out_shape=jax.ShapeDtypeStruct((B, N, Cout), x.dtype),
        grid=grid,
        in_specs=[
            pl.BlockSpec((1, TN, C), lambda bb, i: (bb, i, 0)),
            pl.BlockSpec((1, 1, C), lambda bb, i: (bb, 0, 0)),
            pl.BlockSpec((1, 1, C), lambda bb, i: (bb, 0, 0)),
            pl.BlockSpec((C, Cout), lambda bb, i: (0, 0)),        # resident weight
            pl.BlockSpec((1, Cout), lambda bb, i: (0, 0)),        # resident bias
        ],
        out_specs=pl.BlockSpec((1, TN, Cout), lambda bb, i: (bb, i, 0)),
        compiler_params=_compiler_params(("parallel", "parallel"), est),
    )(x, shift.reshape(B, 1, C), scale.reshape(B, 1, C), w, b.reshape(1, Cout))


# ----------------------------------------------------------------------------
# Kernel 2: plain tiled matmul + bias.  Rows are flattened so tiny groups
# (e.g. the d_t-row temporal groups) still get large, MXU-friendly row tiles.
# Weight is VMEM-resident.
# ----------------------------------------------------------------------------
def _matmul_bias_kernel(x_ref, w_ref, b_ref, o_ref):
    y = jnp.dot(x_ref[...], w_ref[...], preferred_element_type=jnp.float32)
    o_ref[...] = (y + b_ref[...].astype(jnp.float32)).astype(o_ref.dtype)


def matmul_bias(x, w, b, *, row_target=512):
    G, S, Cin = x.shape
    Cin_w, Cout = w.shape
    assert Cin_w == Cin
    R = G * S
    x2 = x.reshape(R, Cin)
    TR = _row_tile(R, row_target)
    est = _est_vmem(((TR, Cin), x.dtype), ((Cin, Cout), w.dtype), ((TR, Cout), x.dtype))
    out = pl.pallas_call(
        _matmul_bias_kernel,
        out_shape=jax.ShapeDtypeStruct((R, Cout), x.dtype),
        grid=(R // TR,),
        in_specs=[
            pl.BlockSpec((TR, Cin), lambda i: (i, 0)),
            pl.BlockSpec((Cin, Cout), lambda i: (0, 0)),          # resident weight
            pl.BlockSpec((1, Cout), lambda i: (0, 0)),
        ],
        out_specs=pl.BlockSpec((TR, Cout), lambda i: (i, 0)),
        compiler_params=_compiler_params(("parallel",), est),
    )(x2, w, b.reshape(1, Cout))
    return out.reshape(G, S, Cout)


# ----------------------------------------------------------------------------
# Kernel 3: matmul + bias with fused gated-residual epilogue.
#   out[b, i, :] = resid[b, i, :] + gate[b, :] * (h[b, i, :] @ W + bias)
# Weight is VMEM-resident.
# ----------------------------------------------------------------------------
def _matmul_gated_residual_kernel(h_ref, w_ref, b_ref, r_ref, g_ref, o_ref):
    y = jnp.dot(h_ref[0], w_ref[...], preferred_element_type=jnp.float32)
    y = y + b_ref[...].astype(jnp.float32)
    r = r_ref[0].astype(jnp.float32)
    g = g_ref[0].astype(jnp.float32)
    o_ref[0] = (r + g * y).astype(o_ref.dtype)


def matmul_gated_residual(h, w, b, resid, gate, *, row_target=256):
    B, N, Cin = h.shape
    Cin_w, Cout = w.shape
    assert Cin_w == Cin and resid.shape == (B, N, Cout)
    TN = _row_tile(N, row_target)
    grid = (B, N // TN)
    est = _est_vmem(((TN, Cin), h.dtype), ((Cin, Cout), w.dtype),
                    ((TN, Cout), resid.dtype), ((TN, Cout), resid.dtype))
    return pl.pallas_call(
        _matmul_gated_residual_kernel,
        out_shape=jax.ShapeDtypeStruct((B, N, Cout), resid.dtype),
        grid=grid,
        in_specs=[
            pl.BlockSpec((1, TN, Cin), lambda bb, i: (bb, i, 0)),
            pl.BlockSpec((Cin, Cout), lambda bb, i: (0, 0)),      # resident weight
            pl.BlockSpec((1, Cout), lambda bb, i: (0, 0)),
            pl.BlockSpec((1, TN, Cout), lambda bb, i: (bb, i, 0)),
            pl.BlockSpec((1, 1, Cout), lambda bb, i: (bb, 0, 0)),
        ],
        out_specs=pl.BlockSpec((1, TN, Cout), lambda bb, i: (bb, i, 0)),
        compiler_params=_compiler_params(("parallel", "parallel"), est),
    )(h, w, b.reshape(1, Cout), resid, gate.reshape(B, 1, Cout))


# ----------------------------------------------------------------------------
# Kernel 4: grouped multi-head attention with heads packed along the channel
# dim (no XLA head split/merge transposes).  Two paths:
#   * single-KV fast path (whole KV sequence in one tile; plain softmax),
#   * flash path (KV-tiled online softmax with f32 VMEM scratch).
# Output is written head-merged / lane-dense: (groups, rows, H*Dh).
# ----------------------------------------------------------------------------
def _mh_attention_kernel(q_ref, k_ref, v_ref, o_ref, *, H, Dh, scale):
    q_all = q_ref[...]                                     # (GB, TQ, C)
    k_all = k_ref[...]                                     # (GB, TK, C)
    v_all = v_ref[...]
    for h in range(H):
        sl = slice(h * Dh, (h + 1) * Dh)
        q = q_all[:, :, sl] * scale
        k = k_all[:, :, sl]
        v = v_all[:, :, sl]
        s = jnp.einsum("gqd,gkd->gqk", q, k, preferred_element_type=jnp.float32)
        m = jnp.max(s, axis=-1, keepdims=True)
        p = jnp.exp(s - m)
        denom = jnp.sum(p, axis=-1, keepdims=True)
        o = jnp.einsum("gqk,gkd->gqd", p.astype(v.dtype), v,
                       preferred_element_type=jnp.float32)
        o_ref[:, :, sl] = (o * pl.reciprocal(denom, approx=True)).astype(o_ref.dtype)


def _mh_flash_attention_kernel(q_ref, k_ref, v_ref, o_ref, m_ref, l_ref, acc_ref,
                               *, H, Dh, scale):
    kv = pl.program_id(2)

    @pl.when(kv == 0)
    def _():
        m_ref[...] = jnp.full(m_ref.shape, -jnp.inf, dtype=jnp.float32)
        l_ref[...] = jnp.zeros_like(l_ref)
        acc_ref[...] = jnp.zeros_like(acc_ref)

    q_all = q_ref[...]
    k_all = k_ref[...]
    v_all = v_ref[...]
    for h in range(H):
        sl = slice(h * Dh, (h + 1) * Dh)
        hs = slice(h, h + 1)
        q = q_all[:, :, sl] * scale
        k = k_all[:, :, sl]
        v = v_all[:, :, sl]
        s = jnp.einsum("gqd,gkd->gqk", q, k, preferred_element_type=jnp.float32)
        m_prev = m_ref[:, :, hs]
        m_new = jnp.maximum(m_prev, jnp.max(s, axis=-1, keepdims=True))
        alpha = jnp.exp(m_prev - m_new)
        p = jnp.exp(s - m_new)
        l_ref[:, :, hs] = alpha * l_ref[:, :, hs] + jnp.sum(p, axis=-1, keepdims=True)
        acc_ref[:, :, sl] = alpha * acc_ref[:, :, sl] + jnp.einsum(
            "gqk,gkd->gqd", p.astype(v.dtype), v, preferred_element_type=jnp.float32)
        m_ref[:, :, hs] = m_new

    @pl.when(kv == pl.num_programs(2) - 1)
    def _():
        inv_l = pl.reciprocal(l_ref[...], approx=True)      # (GB, TQ, H)
        for h in range(H):
            sl = slice(h * Dh, (h + 1) * Dh)
            o_ref[:, :, sl] = (acc_ref[:, :, sl] * inv_l[:, :, h:h + 1]
                               ).astype(o_ref.dtype)


def _grouped_attention(q_src, k_src, v_src, *, q_col, k_col, v_col, C, num_heads,
                       scale, q_target=256, kv_target=512, group_target=256):
    G, Sq, _ = q_src.shape
    Gk, Skv, _ = k_src.shape
    assert Gk == G and C % num_heads == 0
    # TODO(synk): support C not a multiple of 128 by loading full-width blocks
    # and slicing q/k/v columns in-kernel (not needed for C=1152 production).
    assert C % 128 == 0, "head-packed attention blocks require C % 128 == 0"
    Dh = C // num_heads
    TQ = _row_tile(Sq, q_target)
    TK = _row_tile(Skv, kv_target)
    GB = _group_tile(G, max(TQ, TK), group_target)
    single_kv = (TK == Skv)
    out_shape = jax.ShapeDtypeStruct((G, Sq, C), q_src.dtype)
    est = _est_vmem(((GB, TQ, C), q_src.dtype), ((GB, TK, C), k_src.dtype),
                    ((GB, TK, C), v_src.dtype), ((GB, TQ, C), q_src.dtype),
                    ((GB, TQ, C), jnp.float32))

    if single_kv:
        kernel = functools.partial(_mh_attention_kernel, H=num_heads, Dh=Dh, scale=scale)
        grid = (G // GB, Sq // TQ)
        in_specs = [
            pl.BlockSpec((GB, TQ, C), lambda g, i: (g, i, q_col)),
            pl.BlockSpec((GB, TK, C), lambda g, i: (g, 0, k_col)),
            pl.BlockSpec((GB, TK, C), lambda g, i: (g, 0, v_col)),
        ]
        out_specs = pl.BlockSpec((GB, TQ, C), lambda g, i: (g, i, 0))
        scratch = []
        sem = ("parallel", "parallel")
    else:
        kernel = functools.partial(_mh_flash_attention_kernel, H=num_heads, Dh=Dh,
                                   scale=scale)
        grid = (G // GB, Sq // TQ, Skv // TK)
        in_specs = [
            pl.BlockSpec((GB, TQ, C), lambda g, i, j: (g, i, q_col)),
            pl.BlockSpec((GB, TK, C), lambda g, i, j: (g, j, k_col)),
            pl.BlockSpec((GB, TK, C), lambda g, i, j: (g, j, v_col)),
        ]
        out_specs = pl.BlockSpec((GB, TQ, C), lambda g, i, j: (g, i, 0))
        scratch = [pltpu.VMEM((GB, TQ, num_heads), jnp.float32),   # running max
                   pltpu.VMEM((GB, TQ, num_heads), jnp.float32),   # running denom
                   pltpu.VMEM((GB, TQ, C), jnp.float32)]           # output accumulator
        sem = ("parallel", "parallel", "arbitrary")

    return pl.pallas_call(
        kernel, out_shape=out_shape, grid=grid,
        in_specs=in_specs, out_specs=out_specs, scratch_shapes=scratch,
        compiler_params=_compiler_params(sem, est),
    )(q_src, k_src, v_src)


def grouped_self_attention(qkv, num_heads, *, scale, q_target=256, kv_target=512,
                           group_target=256):
    # qkv: (groups, seq, 3C) with channel layout [q heads | k heads | v heads].
    G, S, C3 = qkv.shape
    C = C3 // 3
    assert 3 * C == C3
    return _grouped_attention(qkv, qkv, qkv, q_col=0, k_col=1, v_col=2, C=C,
                              num_heads=num_heads, scale=scale, q_target=q_target,
                              kv_target=kv_target, group_target=group_target)


def grouped_cross_attention(q, kv, num_heads, *, scale, q_target=256, kv_target=512):
    # q: (groups, Sq, C); kv: (groups, Skv, 2C) with layout [k heads | v heads].
    G, Sq, C = q.shape
    Gk, Skv, C2 = kv.shape
    assert Gk == G and C2 == 2 * C
    return _grouped_attention(q, kv, kv, q_col=0, k_col=0, v_col=1, C=C,
                              num_heads=num_heads, scale=scale, q_target=q_target,
                              kv_target=kv_target)


# ----------------------------------------------------------------------------
# Kernel 5: fused MLP (single shot, resident weights)
#   out = x + gate * ( GELU_tanh( (LN(x)*(1+scale)+shift) @ W1 + b1 ) @ W2 + b2 )
# The (rows, hidden) activation never leaves VMEM.
# ----------------------------------------------------------------------------
def _fused_mlp_kernel(x_ref, shift_ref, scale_ref, gate_ref,
                      w1_ref, b1_ref, w2_ref, b2_ref, o_ref, *, eps):
    x = x_ref[0].astype(jnp.float32)                       # (TN, C)
    mu = jnp.mean(x, axis=-1, keepdims=True)
    xc = x - mu
    var = jnp.mean(xc * xc, axis=-1, keepdims=True)
    xn = xc * jax.lax.rsqrt(var + eps)
    shift = shift_ref[0].astype(jnp.float32)
    scale = scale_ref[0].astype(jnp.float32)
    xm = (xn * (1.0 + scale) + shift).astype(x_ref.dtype)
    hid = jnp.dot(xm, w1_ref[...], preferred_element_type=jnp.float32)
    hid = _gelu_tanh(hid + b1_ref[...].astype(jnp.float32))
    y = jnp.dot(hid.astype(x_ref.dtype), w2_ref[...],
                preferred_element_type=jnp.float32)
    y = y + b2_ref[...].astype(jnp.float32)
    g = gate_ref[0].astype(jnp.float32)
    o_ref[0] = (x + g * y).astype(o_ref.dtype)


def fused_mlp(x, shift, scale, gate, w1, b1, w2, b2, *, eps=1e-6, row_target=256):
    B, N, C = x.shape
    C1, Hd = w1.shape
    assert C1 == C and w2.shape == (Hd, C)
    TN = _row_tile(N, row_target)
    grid = (B, N // TN)
    # TODO(synk): on v7x (64 MiB VMEM) with f32 weights at production sizes,
    # single-buffer the resident weights (pl.Buffered(1)) or fall back to a
    # hidden-axis-pipelined variant; bf16 / test sizes fit comfortably.
    est = _est_vmem(((TN, C), x.dtype), ((C, Hd), w1.dtype), ((Hd, C), w2.dtype),
                    ((TN, Hd), jnp.float32), ((TN, C), x.dtype))
    return pl.pallas_call(
        functools.partial(_fused_mlp_kernel, eps=eps),
        out_shape=jax.ShapeDtypeStruct((B, N, C), x.dtype),
        grid=grid,
        in_specs=[
            pl.BlockSpec((1, TN, C), lambda b, i: (b, i, 0)),
            pl.BlockSpec((1, 1, C), lambda b, i: (b, 0, 0)),
            pl.BlockSpec((1, 1, C), lambda b, i: (b, 0, 0)),
            pl.BlockSpec((1, 1, C), lambda b, i: (b, 0, 0)),
            pl.BlockSpec((C, Hd), lambda b, i: (0, 0)),           # resident fc1
            pl.BlockSpec((1, Hd), lambda b, i: (0, 0)),
            pl.BlockSpec((Hd, C), lambda b, i: (0, 0)),           # resident fc2
            pl.BlockSpec((1, C), lambda b, i: (0, 0)),
        ],
        out_specs=pl.BlockSpec((1, TN, C), lambda b, i: (b, i, 0)),
        compiler_params=_compiler_params(("parallel", "parallel"), est),
    )(x, shift.reshape(B, 1, C), scale.reshape(B, 1, C), gate.reshape(B, 1, C),
      w1, b1.reshape(1, Hd), w2, b2.reshape(1, C))


# ----------------------------------------------------------------------------
# Full STDiTBlock forward
# ----------------------------------------------------------------------------
def stdit_block_forward(params, x, y, t, d_s, d_t, num_heads, tpe=None, eps=1e-6):
    B, N, C = x.shape
    assert N == d_s * d_t
    H = num_heads
    Dh = C // H
    scale = float(Dh) ** -0.5

    t6 = params["scale_shift_table"][None] + t.reshape(B, 6, C)
    shift_msa, scale_msa, gate_msa = t6[:, 0], t6[:, 1], t6[:, 2]
    shift_mlp, scale_mlp, gate_mlp = t6[:, 3], t6[:, 4], t6[:, 5]

    pa, pt, pc, pm = params["attn"], params["attn_temp"], params["cross_attn"], params["mlp"]

    # ---- spatial self-attention: LN + t2i_modulate fused into the qkv
    #      projection; heads stay packed -> no XLA split/merge transposes ----
    qkv = ln_mod_matmul(x, shift_msa, scale_msa, pa["qkv_w"], pa["qkv_b"], eps=eps)
    o = grouped_self_attention(qkv.reshape(B * d_t, d_s, 3 * C), H, scale=scale)
    x = matmul_gated_residual(o.reshape(B, N, C), pa["proj_w"], pa["proj_b"], x, gate_msa)

    # ---- temporal self-attention (residual reuses gate_msa like the reference) ----
    # TODO(synk): sequence-parallel all_to_all_comm path not implemented (single device).
    # TODO(synk): the (b t s c) <-> (b s t c) layout change is still two XLA
    # transposes of the (B, N, C) activation; folding them into BlockSpec index
    # maps needs strided row gathers that plain BlockSpecs can't express.
    x_t = jnp.swapaxes(x.reshape(B, d_t, d_s, C), 1, 2).reshape(B * d_s, d_t, C)
    if tpe is not None:
        x_t = x_t + tpe                                    # tpe: (1, d_t, C)
    qkv_t = matmul_bias(x_t, pt["qkv_w"], pt["qkv_b"])     # (B*d_s, d_t, 3C)
    o_t = grouped_self_attention(qkv_t, H, scale=scale)    # (B*d_s, d_t, C)
    o = jnp.swapaxes(o_t.reshape(B, d_s, d_t, C), 1, 2).reshape(B, N, C)
    x = matmul_gated_residual(o, pt["proj_w"], pt["proj_b"], x, gate_msa)

    # ---- cross attention (mask=None xformers path: flattened-batch queries
    #      attend to all flattened cond tokens); residual fused into the proj ----
    q = matmul_bias(x, pc["q_w"], pc["q_b"])               # (B, N, C)
    kv = matmul_bias(y, pc["kv_w"], pc["kv_b"])            # (B, M, 2C)
    o = grouped_cross_attention(q.reshape(1, B * N, C),
                                kv.reshape(1, -1, 2 * C), H, scale=scale)
    ones_gate = jnp.ones((B, C), x.dtype)
    x = matmul_gated_residual(o.reshape(B, N, C), pc["proj_w"], pc["proj_b"], x, ones_gate)

    # ---- fused MLP: LN+modulate -> fc1 -> tanh-GELU -> fc2 -> gated residual ----
    x = fused_mlp(x, shift_mlp, scale_mlp, gate_mlp,
                  pm["fc1_w"], pm["fc1_b"], pm["fc2_w"], pm["fc2_b"], eps=eps)
    return x


# ----------------------------------------------------------------------------
# Pure-JAX reference (for an in-script sanity check) + parameter init
# ----------------------------------------------------------------------------
def _reference_forward(params, x, y, t, d_s, d_t, num_heads, tpe=None, eps=1e-6):
    B, N, C = x.shape
    H = num_heads
    Dh = C // H
    sc = float(Dh) ** -0.5
    t6 = params["scale_shift_table"][None] + t.reshape(B, 6, C)
    sm, scm, gm = t6[:, 0:1], t6[:, 1:2], t6[:, 2:3]
    sp, scp, gp = t6[:, 3:4], t6[:, 4:5], t6[:, 5:6]

    def ln(v):
        mu = jnp.mean(v, -1, keepdims=True)
        var = jnp.mean((v - mu) ** 2, -1, keepdims=True)
        return (v - mu) / jnp.sqrt(var + eps)

    def mha(xx, p):
        G, S, _ = xx.shape
        qkv = xx @ p["qkv_w"] + p["qkv_b"]
        qkv = qkv.reshape(G, S, 3, H, Dh).transpose(2, 0, 3, 1, 4)
        q, k, v = qkv[0], qkv[1], qkv[2]
        s = jnp.einsum("ghqd,ghkd->ghqk", q * sc, k)
        a = jax.nn.softmax(s, axis=-1)
        o = jnp.einsum("ghqk,ghkd->ghqd", a, v)
        o = o.transpose(0, 2, 1, 3).reshape(G, S, C)
        return o @ p["proj_w"] + p["proj_b"]

    xm = ln(x) * (1 + scm) + sm
    xs = xm.reshape(B * d_t, d_s, C)
    xs = mha(xs, params["attn"]).reshape(B, N, C)
    x = x + gm * xs

    xt = x.reshape(B, d_t, d_s, C).transpose(0, 2, 1, 3).reshape(B * d_s, d_t, C)
    if tpe is not None:
        xt = xt + tpe
    xt = mha(xt, params["attn_temp"])
    xt = xt.reshape(B, d_s, d_t, C).transpose(0, 2, 1, 3).reshape(B, N, C)
    x = x + gm * xt

    pc = params["cross_attn"]
    q = (x.reshape(B * N, C) @ pc["q_w"] + pc["q_b"]).reshape(B * N, H, Dh)
    kv = (y.reshape(-1, C) @ pc["kv_w"] + pc["kv_b"]).reshape(-1, 2, H, Dh)
    k, v = kv[:, 0], kv[:, 1]
    s = jnp.einsum("qhd,khd->hqk", q * sc, k)
    a = jax.nn.softmax(s, axis=-1)
    o = jnp.einsum("hqk,khd->qhd", a, v).reshape(B * N, C)
    x = x + (o @ pc["proj_w"] + pc["proj_b"]).reshape(B, N, C)

    pm = params["mlp"]
    xm2 = ln(x) * (1 + scp) + sp
    hid = xm2 @ pm["fc1_w"] + pm["fc1_b"]
    hid = _gelu_tanh(hid)
    x = x + gp * (hid @ pm["fc2_w"] + pm["fc2_b"])
    return x


def init_params(key, C, mlp_ratio=4.0):
    hidden = int(C * mlp_ratio)
    ks = jax.random.split(key, 12)

    def nrm(k, shape, s=0.02):
        return jax.random.normal(k, shape, jnp.float32) * s

    return {
        "scale_shift_table": jax.random.normal(ks[0], (6, C), jnp.float32) / (C ** 0.5),
        "attn": {
            "qkv_w": nrm(ks[1], (C, 3 * C)), "qkv_b": jnp.zeros((3 * C,), jnp.float32),
            "proj_w": nrm(ks[2], (C, C)), "proj_b": jnp.zeros((C,), jnp.float32),
        },
        "attn_temp": {
            "qkv_w": nrm(ks[3], (C, 3 * C)), "qkv_b": jnp.zeros((3 * C,), jnp.float32),
            "proj_w": nrm(ks[4], (C, C)), "proj_b": jnp.zeros((C,), jnp.float32),
        },
        "cross_attn": {
            "q_w": nrm(ks[5], (C, C)), "q_b": jnp.zeros((C,), jnp.float32),
            "kv_w": nrm(ks[6], (C, 2 * C)), "kv_b": jnp.zeros((2 * C,), jnp.float32),
            "proj_w": nrm(ks[7], (C, C)), "proj_b": jnp.zeros((C,), jnp.float32),
        },
        "mlp": {
            "fc1_w": nrm(ks[8], (C, hidden)), "fc1_b": jnp.zeros((hidden,), jnp.float32),
            "fc2_w": nrm(ks[9], (hidden, C)), "fc2_b": jnp.zeros((C,), jnp.float32),
        },
    }


if __name__ == "__main__":
    B, C, num_heads = 2, 128, 4
    d_t, d_s = 2, 8
    N = d_t * d_s
    M = 8  # cond tokens per sample

    key = jax.random.PRNGKey(0)
    k_param, kx, ky, kt, ktpe, kflash = jax.random.split(key, 6)

    params = init_params(k_param, C)
    x = jax.random.normal(kx, (B, N, C), jnp.float32)
    y = jax.random.normal(ky, (B, M, C), jnp.float32)
    t = jax.random.normal(kt, (B, 6 * C), jnp.float32)
    tpe = jax.random.normal(ktpe, (1, d_t, C), jnp.float32)

    out = jax.block_until_ready(
        stdit_block_forward(params, x, y, t, d_s, d_t, num_heads, tpe=tpe))
    assert out.shape == (B, N, C) and bool(jnp.all(jnp.isfinite(out)))

    ref = jax.block_until_ready(
        _reference_forward(params, x, y, t, d_s, d_t, num_heads, tpe=tpe))
    assert bool(jnp.allclose(out, ref, rtol=5e-2, atol=5e-2)), \
        float(jnp.max(jnp.abs(out - ref)))

    # Explicitly exercise the multi-KV-tile (online-softmax) attention path,
    # which the tiny main shapes only hit via the single-KV fast path.
    Dh = C // num_heads
    qkv_f = jax.random.normal(kflash, (2, 16, 3 * C), jnp.float32)
    o_flash = jax.block_until_ready(
        grouped_self_attention(qkv_f, num_heads, scale=float(Dh) ** -0.5,
                               q_target=8, kv_target=8, group_target=32))
    qkv_r = qkv_f.reshape(2, 16, 3, num_heads, Dh)
    qr, kr, vr = qkv_r[:, :, 0], qkv_r[:, :, 1], qkv_r[:, :, 2]
    sr = jnp.einsum("gqhd,gkhd->ghqk", qr * (float(Dh) ** -0.5), kr)
    o_ref2 = jnp.einsum("ghqk,gkhd->gqhd", jax.nn.softmax(sr, axis=-1), vr)
    o_ref2 = o_ref2.reshape(2, 16, C)
    assert bool(jnp.allclose(o_flash, o_ref2, rtol=2e-2, atol=2e-2)), \
        float(jnp.max(jnp.abs(o_flash - o_ref2)))

    print("KERNEL_OK")
</pallas_src>

<mosaic_0001>
module attributes {stable_mosaic.version = 11 : i64} {
  func.func @_ln_mod_matmul_kernel(%arg0: i32, %arg1: i32, %arg2: memref<1x16x128xf32, #tpu.memory_space<vmem>>, %arg3: memref<1x1x128xf32, #tpu.memory_space<vmem>>, %arg4: memref<1x1x128xf32, #tpu.memory_space<vmem>>, %arg5: memref<128x384xf32, #tpu.memory_space<vmem>>, %arg6: memref<1x384xf32, #tpu.memory_space<vmem>>, %arg7: memref<1x16x384xf32, #tpu.memory_space<vmem>>) attributes {dimension_semantics = [#tpu.dimension_semantics<parallel>, #tpu.dimension_semantics<parallel>], iteration_bounds = array<i64: 2, 1>, scalar_prefetch = 0 : i64, scratch_operands = 0 : i64, tpu.core_type = #tpu.core_type<tc>, window_params = [{transform_indices = @transform_0, window_bounds = array<i64: 1, 16, 128>}, {transform_indices = @transform_1, window_bounds = array<i64: 1, 1, 128>}, {transform_indices = @transform_2, window_bounds = array<i64: 1, 1, 128>}, {pipeline_mode = #tpu.pipeline_mode<synchronous>, transform_indices = @transform_3, window_bounds = array<i64: 128, 384>}, {pipeline_mode = #tpu.pipeline_mode<synchronous>, transform_indices = @transform_4, window_bounds = array<i64: 1, 384>}, {transform_indices = @transform_5, window_bounds = array<i64: 1, 16, 384>}]} {
    %c0 = arith.constant 0 : index
    %c0_0 = arith.constant 0 : index
    %c0_1 = arith.constant 0 : index
    %0 = vector.load %arg2[%c0, %c0_0, %c0_1] : memref<1x16x128xf32, #tpu.memory_space<vmem>>, vector<1x16x128xf32>
    %1 = vector.shape_cast %0 : vector<1x16x128xf32> to vector<16x128xf32>
    %cst = arith.constant dense<0.000000e+00> : vector<16xf32>
    %2 = vector.multi_reduction <add>, %1, %cst [1] : vector<16x128xf32> to vector<16xf32>
    %3 = vector.shape_cast %2 : vector<16xf32> to vector<16x1xf32>
    %cst_2 = arith.constant 1.280000e+02 : f32
    %4 = vector.broadcast %cst_2 : f32 to vector<16x1xf32>
    %5 = arith.divf %3, %4 : vector<16x1xf32>
    %6 = vector.broadcast %5 : vector<16x1xf32> to vector<16x128xf32>
    %7 = arith.subf %1, %6 : vector<16x128xf32>
    %8 = arith.mulf %7, %7 : vector<16x128xf32>
    %cst_3 = arith.constant dense<0.000000e+00> : vector<16xf32>
    %9 = vector.multi_reduction <add>, %8, %cst_3 [1] : vector<16x128xf32> to vector<16xf32>
    %10 = vector.shape_cast %9 : vector<16xf32> to vector<16x1xf32>
    %cst_4 = arith.constant 1.280000e+02 : f32
    %11 = vector.broadcast %cst_4 : f32 to vector<16x1xf32>
    %12 = arith.divf %10, %11 : vector<16x1xf32>
    %cst_5 = arith.constant 9.99999997E-7 : f32
    %13 = vector.broadcast %cst_5 : f32 to vector<16x1xf32>
    %14 = arith.addf %12, %13 : vector<16x1xf32>
    %15 = math.rsqrt %14 : vector<16x1xf32>
    %16 = vector.broadcast %15 : vector<16x1xf32> to vector<16x128xf32>
    %17 = arith.mulf %7, %16 : vector<16x128xf32>
    %c0_6 = arith.constant 0 : index
    %c0_7 = arith.constant 0 : index
    %c0_8 = arith.constant 0 : index
    %18 = vector.load %arg3[%c0_6, %c0_7, %c0_8] : memref<1x1x128xf32, #tpu.memory_space<vmem>>, vector<1x1x128xf32>
    %19 = vector.shape_cast %18 : vector<1x1x128xf32> to vector<1x128xf32>
    %c0_9 = arith.constant 0 : index
    %c0_10 = arith.constant 0 : index
    %c0_11 = arith.constant 0 : index
    %20 = vector.load %arg4[%c0_9, %c0_10, %c0_11] : memref<1x1x128xf32, #tpu.memory_space<vmem>>, vector<1x1x128xf32>
    %21 = vector.shape_cast %20 : vector<1x1x128xf32> to vector<1x128xf32>
    %cst_12 = arith.constant 1.000000e+00 : f32
    %22 = vector.broadcast %cst_12 : f32 to vector<1x128xf32>
    %23 = arith.addf %22, %21 : vector<1x128xf32>
    %24 = vector.broadcast %23 : vector<1x128xf32> to vector<16x128xf32>
    %25 = arith.mulf %17, %24 : vector<16x128xf32>
    %26 = vector.broadcast %19 : vector<1x128xf32> to vector<16x128xf32>
    %27 = arith.addf %25, %26 : vector<16x128xf32>
    %c0_13 = arith.constant 0 : index
    %c0_14 = arith.constant 0 : index
    %28 = vector.load %arg5[%c0_13, %c0_14] : memref<128x384xf32, #tpu.memory_space<vmem>>, vector<128x384xf32>
    %cst_15 = arith.constant dense<0.000000e+00> : vector<16x384xf32>
    %29 = tpu.matmul %27, %28, %cst_15 {dimension_numbers = #tpu.dot_dimension_numbers<[1], [0], [0], [1], [0, 0, 1, 1], [], []>} : vector<16x128xf32>, vector<128x384xf32>, vector<16x384xf32> -> vector<16x384xf32>
    %c0_16 = arith.constant 0 : index
    %c0_17 = arith.constant 0 : index
    %30 = vector.load %arg6[%c0_16, %c0_17] : memref<1x384xf32, #tpu.memory_space<vmem>>, vector<1x384xf32>
    %31 = vector.broadcast %30 : vector<1x384xf32> to vector<16x384xf32>
    %32 = arith.addf %29, %31 : vector<16x384xf32>
    %c0_18 = arith.constant 0 : index
    %c0_19 = arith.constant 0 : index
    %c0_20 = arith.constant 0 : index
    %33 = vector.load %arg7[%c0_18, %c0_19, %c0_20] : memref<1x16x384xf32, #tpu.memory_space<vmem>>, vector<1x16x384xf32>
    %34 = vector.shape_cast %33 : vector<1x16x384xf32> to vector<16x384xf32>
    %35 = vector.shape_cast %32 : vector<16x384xf32> to vector<1x16x384xf32>
    tpu.vector_store %arg7[%c0_18, %c0_19, %c0_20], %35 {strides = array<i32>} : memref<1x16x384xf32, #tpu.memory_space<vmem>>, vector<1x16x384xf32>,
    return
  }
  func.func @transform_0(%arg0: i32, %arg1: i32) -> (i32, i32, i32) {
    %c0_i32 = arith.constant 0 : i32
    %c0_i32_0 = arith.constant 0 : i32
    return %arg0, %arg1, %c0_i32 : i32, i32, i32
  }
  func.func @transform_1(%arg0: i32, %arg1: i32) -> (i32, i32, i32) {
    %c0_i32 = arith.constant 0 : i32
    %c0_i32_0 = arith.constant 0 : i32
    %c0_i32_1 = arith.constant 0 : i32
    return %arg0, %c0_i32, %c0_i32_0 : i32, i32, i32
  }
  func.func @transform_2(%arg0: i32, %arg1: i32) -> (i32, i32, i32) {
    %c0_i32 = arith.constant 0 : i32
    %c0_i32_0 = arith.constant 0 : i32
    %c0_i32_1 = arith.constant 0 : i32
    return %arg0, %c0_i32, %c0_i32_0 : i32, i32, i32
  }
  func.func @transform_3(%arg0: i32, %arg1: i32) -> (i32, i32) {
    %c0_i32 = arith.constant 0 : i32
    %c0_i32_0 = arith.constant 0 : i32
    %c0_i32_1 = arith.constant 0 : i32
    return %c0_i32, %c0_i32_0 : i32, i32
  }
  func.func @transform_4(%arg0: i32, %arg1: i32) -> (i32, i32) {
    %c0_i32 = arith.constant 0 : i32
    %c0_i32_0 = arith.constant 0 : i32
    %c0_i32_1 = arith.constant 0 : i32
    return %c0_i32, %c0_i32_0 : i32, i32
  }
  func.func @transform_5(%arg0: i32, %arg1: i32) -> (i32, i32, i32) {
    %c0_i32 = arith.constant 0 : i32
    %c0_i32_0 = arith.constant 0 : i32
    return %arg0, %arg1, %c0_i32 : i32, i32, i32
  }
}

</mosaic_0001>

<llo_original>
// kernel: tpu_custom_call.1
$region0: #{tpu_custom_call.1}
  #allocation0 [shape = 'u32[]', space=smem, size = 0x4, offset = 0x4, fixed_abs, tag = 'smem constant byte address 0x4 - core index']
  #allocation1 [shape = 'u32[144,128]{1,0:T(1,128)}', space=vmem, size = 0x12000, scoped, tag = 'internal scratch']
  %s0 = inlined_call_operand.hbm [shape: f32[2,16,128], index: 0, kind: input, shape index: {}]
  %s1 = inlined_call_operand.vmem [shape: f32[2,1,128], index: 1, kind: input, shape index: {}]
  %s2 = inlined_call_operand.vmem [shape: f32[2,1,128], index: 2, kind: input, shape index: {}]
  %s3 = inlined_call_operand.hbm [shape: f32[128,384], index: 3, kind: input, shape index: {}]
  %s4 = inlined_call_operand.vmem [shape: f32[1,384], index: 4, kind: input, shape index: {}]
  %s5 = inlined_call_operand.hbm [shape: f32[2,16,384], index: 5, kind: output, shape index: {}]
  %s6 = sld [smem:[#allocation0]]
  $region61: #{tpu_custom_call.1} parent=0
    _
  %s8 = ssub.s32 1, %s6
  %s9 = scalar_select 0, %s8, %s6
  $region1: #{tpu_custom_call.1} parent=0
    #allocation2 [shape = 'u8[16384]{0}', space=vmem, size = 0x4000, scoped, tag = 'input window, operand 0']
    #allocation3 [shape = 's32[2]{0}', space=sflag, size = 0x8, scoped, tag = 'scoped memory for tpu_custom_call.1']
    #allocation4 [shape = 's32[2]{0}', space=sflag, size = 0x8, scoped, tag = 'scoped memory for tpu_custom_call.1']
    #allocation5 [shape = 'u8[196608]{0}', space=vmem, size = 0x30000, scoped, tag = 'input window, operand 3, single buffered']
    #allocation6 [shape = 's32[1]{0}', space=sflag, size = 0x4, scoped, tag = 'scoped memory for tpu_custom_call.1']
    #allocation7 [shape = 'u8[49152]{0}', space=vmem, size = 0xc000, scoped, tag = 'output window, operand 0']
    %10 = vsyncpa [#allocation3], 0
    %s11 = scalar_lea.sflag [#allocation3], 1
    %12 = vsyncpa %s11, 0
    %13 = vsyncpa [#allocation6], 0
    %14 = vsyncpa [#allocation4], 0
    %s15 = scalar_lea.sflag [#allocation4], 1
    %16 = vsyncpa %s15, 0
    loop: start=0, step=1, limit=4
    $region2: #{tpu_custom_call.1} parent=1 // loop_pre_header
      _
    $region3: #{tpu_custom_call.1} parent=1 // loop_header
      %s18 = sphi 0, %s22
      %p19 = scmp.ge.s32.totalorder %s18, 4
      %s25 = sphi 0, %s37
      %s26 = sphi 0, %s33
      %s27 = sphi 0, %s25
      %s28 = sphi 0, %s26
      %s29 = sphi 0, %s27
      %s30 = sphi 0, %s28
      %s42 = sphi 0, %s44
      %s45 = sphi 0, %s42
      %s46 = sphi 0, %s45
      %s62 = sphi 0, %s46
      %s68 = sphi 0, %s70
      %s71 = sphi 0, %s68
      %s72 = sphi 0, %s71
      %s88 = sphi 0, %s72
      %s94 = sphi 0, %s96
      %s97 = sphi 0, %s94
      %s98 = sphi 0, %s97
      %s114 = sphi 0, %s98
      %s118 = sphi 0, %s118
      %s120 = sphi 0, %s118
      %s121 = sphi 0, %s120
      %s135 = sphi 0, %s121
      %s139 = sphi 0, %s139
      %s141 = sphi 0, %s139
      %s142 = sphi 0, %s141
      %s156 = sphi 0, %s142
      %s164 = sphi 0, %s166
      %s167 = sphi 0, %s164
      %s168 = sphi 0, %s167
      %s184 = sphi 0, %s168
    $region4: #{tpu_custom_call.1} parent=1 // loop_header_branch
      %21 = sbr.rel (%p19) target = $region8
    $region5: #{tpu_custom_call.1} parent=1 // loop_body
      %s23 = ssub.s32 %s18, 1
      %s24 = ssub.s32 %s18, 2
      %s31 = sadd.s32 1, %s26
      %p32 = scmp.ge.s32.totalorder %s31, 1
      %s33 = scalar_select %p32, 0, %s31
      %s34 = sadd.s32 1, %s25
      %s35 = scalar_select %p32, %s34, %s25
      %p36 = scmp.ge.s32.totalorder %s35, 2
      %s37 = scalar_select %p36, 0, %s35
      %s38 = ssub.s32 %s25, %s37
      %s39 = ssub.s32 %s26, %s33
      %s40 = sor.u32 %s38, %s39
      %p41 = scmp.eq.s32.totalorder %s40, 0
      %s43 = sadd.s32 %s42, 1
      %s44 = scalar_select %p41, %s42, %s43
      %p47 = pneg %p41
      %p48 = scmp.eq.s32.totalorder %s18, 1
      %p49 = por %p47, %p48
      %p50 = scmp.ne.s32.totalorder %s42, %s45
      %p51 = scmp.eq.s32.totalorder %s18, 0
      %p52 = por %p50, %p51
      %p53 = scmp.ne.s32.totalorder %s42, %s45
      %p54 = scmp.eq.s32.totalorder %s23, 1
      %p55 = por %p53, %p54
      %p56 = scmp.ne.s32.totalorder %s45, %s46
      %p57 = scmp.eq.s32.totalorder %s23, 0
      %p58 = por %p56, %p57
      %p59 = scmp.ne.s32.totalorder %s45, %s46
      %p60 = scmp.eq.s32.totalorder %s24, 1
      %p61 = por %p59, %p60
      %p63 = scmp.ne.s32.totalorder %s46, %s62
      %p64 = scmp.eq.s32.totalorder %s24, 0
      %p65 = por %p63, %p64
      %s66 = ssub.s32 %s25, %s37
      %p67 = scmp.eq.s32.totalorder %s66, 0
      %s69 = sadd.s32 %s68, 1
      %s70 = scalar_select %p67, %s68, %s69
      %p73 = pneg %p67
      %p74 = scmp.eq.s32.totalorder %s18, 1
      %p75 = por %p73, %p74
      %p76 = scmp.ne.s32.totalorder %s68, %s71
      %p77 = scmp.eq.s32.totalorder %s18, 0
      %p78 = por %p76, %p77
      %p79 = scmp.ne.s32.totalorder %s68, %s71
      %p80 = scmp.eq.s32.totalorder %s23, 1
      %p81 = por %p79, %p80
      %p82 = scmp.ne.s32.totalorder %s71, %s72
      %p83 = scmp.eq.s32.totalorder %s23, 0
      %p84 = por %p82, %p83
      %p85 = scmp.ne.s32.totalorder %s71, %s72
      %p86 = scmp.eq.s32.totalorder %s24, 1
      %p87 = por %p85, %p86
      %p89 = scmp.ne.s32.totalorder %s72, %s88
      %p90 = scmp.eq.s32.totalorder %s24, 0
      %p91 = por %p89, %p90
      %s92 = ssub.s32 %s25, %s37
      %p93 = scmp.eq.s32.totalorder %s92, 0
      %s95 = sadd.s32 %s94, 1
      %s96 = scalar_select %p93, %s94, %s95
      %p99 = pneg %p93
      %p100 = scmp.eq.s32.totalorder %s18, 1
      %p101 = por %p99, %p100
      %p102 = scmp.ne.s32.totalorder %s94, %s97
      %p103 = scmp.eq.s32.totalorder %s18, 0
      %p104 = por %p102, %p103
      %p105 = scmp.ne.s32.totalorder %s94, %s97
      %p106 = scmp.eq.s32.totalorder %s23, 1
      %p107 = por %p105, %p106
      %p108 = scmp.ne.s32.totalorder %s97, %s98
      %p109 = scmp.eq.s32.totalorder %s23, 0
      %p110 = por %p108, %p109
      %p111 = scmp.ne.s32.totalorder %s97, %s98
      %p112 = scmp.eq.s32.totalorder %s24, 1
      %p113 = por %p111, %p112
      %p115 = scmp.ne.s32.totalorder %s98, %s114
      %p116 = scmp.eq.s32.totalorder %s24, 0
      %p117 = por %p115, %p116
      %s119 = sadd.s32 %s118, 1
      %p122 = scmp.eq.s32.totalorder %s18, 1
      %p123 = scmp.ne.s32.totalorder %s118, %s120
      %p124 = scmp.eq.s32.totalorder %s18, 0
      %p125 = por %p123, %p124
      %p126 = scmp.ne.s32.totalorder %s118, %s120
      %p127 = scmp.eq.s32.totalorder %s23, 1
      %p128 = por %p126, %p127
      %p129 = scmp.ne.s32.totalorder %s120, %s121
      %p130 = scmp.eq.s32.totalorder %s23, 0
      %p131 = por %p129, %p130
      %p132 = scmp.ne.s32.totalorder %s120, %s121
      %p133 = scmp.eq.s32.totalorder %s24, 1
      %p134 = por %p132, %p133
      %p136 = scmp.ne.s32.totalorder %s121, %s135
      %p137 = scmp.eq.s32.totalorder %s24, 0
      %p138 = por %p136, %p137
      %s140 = sadd.s32 %s139, 1
      %p143 = scmp.eq.s32.totalorder %s18, 1
      %p144 = scmp.ne.s32.totalorder %s139, %s141
      %p145 = scmp.eq.s32.totalorder %s18, 0
      %p146 = por %p144, %p145
      %p147 = scmp.ne.s32.totalorder %s139, %s141
      %p148 = scmp.eq.s32.totalorder %s23, 1
      %p149 = por %p147, %p148
      %p150 = scmp.ne.s32.totalorder %s141, %s142
      %p151 = scmp.eq.s32.totalorder %s23, 0
      %p152 = por %p150, %p151
      %p153 = scmp.ne.s32.totalorder %s141, %s142
      %p154 = scmp.eq.s32.totalorder %s24, 1
      %p155 = por %p153, %p154
      %p157 = scmp.ne.s32.totalorder %s142, %s156
      %p158 = scmp.eq.s32.totalorder %s24, 0
      %p159 = por %p157, %p158
      %s160 = ssub.s32 %s25, %s37
      %s161 = ssub.s32 %s26, %s33
      %s162 = sor.u32 %s160, %s161
      %p163 = scmp.eq.s32.totalorder %s162, 0
      %s165 = sadd.s32 %s164, 1
      %s166 = scalar_select %p163, %s164, %s165
      %p169 = pneg %p163
      %p170 = scmp.eq.s32.totalorder %s18, 1
      %p171 = por %p169, %p170
      %p172 = scmp.ne.s32.totalorder %s164, %s167
      %p173 = scmp.eq.s32.totalorder %s18, 0
      %p174 = por %p172, %p173
      %p175 = scmp.ne.s32.totalorder %s164, %s167
      %p176 = scmp.eq.s32.totalorder %s23, 1
      %p177 = por %p175, %p176
      %p178 = scmp.ne.s32.totalorder %s167, %s168
      %p179 = scmp.eq.s32.totalorder %s23, 0
      %p180 = por %p178, %p179
      %p181 = scmp.ne.s32.totalorder %s167, %s168
      %p182 = scmp.eq.s32.totalorder %s24, 1
      %p183 = por %p181, %p182
      %p185 = scmp.ne.s32.totalorder %s168, %s184
      %p186 = scmp.eq.s32.totalorder %s24, 0
      %p187 = por %p185, %p186
      %p188 = scmp.le.s32.totalorder 1, %s18
      %p189 = scmp.lt.s32.totalorder %s18, 3
      %p190 = pnand %p188, %p189
      %p191 = pneg %p190
      // Predicated region
      $region9: #{tpu_custom_call.1} parent=5 // pred_check
        _
      $region10: #{tpu_custom_call.1} parent=5 // pred_check_branch
        %193 = sbr.rel (%p190) target = $region12
      $region11: #{tpu_custom_call.1} parent=5 // pred_region
        %s194 = ssub.s32 %s18, 1
        // Predicated region
        $region13: #{tpu_custom_call.1} parent=11 // pred_check
          %p195 = pneg %p131
        $region14: #{tpu_custom_call.1} parent=11 // pred_check_branch
          %197 = sbr.rel (%p195) target = $region16
        $region15: #{tpu_custom_call.1} parent=11 // pred_region
          %s199 = ssub.s32 6144, 6144
          %200 = vsyncadd [#allocation6], %s199
          %s201 = sshll.u32 [#allocation5], 4
          %s202 = int_to_ptr.vmem [resolvable:$true] %s201
          %207 = dma.hbm_to_vmem [thread:$0]  %s3, 6144, %s202, [#allocation6], 384, 384, 24
        $region16: #{tpu_custom_call.1} parent=11 // pred_fallthru
          _
        // Predicated region
        $region17: #{tpu_custom_call.1} parent=11 // pred_check
          %p208 = pneg %p152
        $region18: #{tpu_custom_call.1} parent=11 // pred_check_branch
          %210 = sbr.rel (%p208) target = $region20
        $region19: #{tpu_custom_call.1} parent=11 // pred_region
          _
        $region20: #{tpu_custom_call.1} parent=11 // pred_fallthru
          _
      $region12: #{tpu_custom_call.1} parent=5 // pred_fallthru
        _
      %p211 = scmp.lt.s32.totalorder %s18, 2
      // Predicated region
      $region21: #{tpu_custom_call.1} parent=5 // pred_check
        %p212 = pneg %p211
      $region22: #{tpu_custom_call.1} parent=5 // pred_check_branch
        %214 = sbr.rel (%p212) target = $region24
      $region23: #{tpu_custom_call.1} parent=5 // pred_region
        // Predicated region
        $region25: #{tpu_custom_call.1} parent=23 // pred_check
          %p215 = pneg %p52
        $region26: #{tpu_custom_call.1} parent=23 // pred_check_branch
          %217 = sbr.rel (%p215) target = $region28
        $region27: #{tpu_custom_call.1} parent=23 // pred_region
          %s218 = sand.u32 %s42, 1
          %s219 = scalar_lea.sflag [#allocation3], %s218
          %s220 = sand.u32 %s42, 1
          %s221 = smul.addr %s220, 16
          %s222 = scalar_lea.vmem [#allocation2], %s221
          %s223 = smul.u32 2, %s26
          %s225 = ssub.s32 256, 256
          %226 = vsyncadd %s219, %s225
          %s227 = smul.addr %s25, 2
          %s228 = sadd.s32 %s223, %s227
          %s229 = smul.addr %s228, 128
          %s230 = scalar_lea.hbm %s0, %s229
          %s231 = sshll.u32 %s222, 4
          %s232 = int_to_ptr.vmem [resolvable:$true] %s231
          %237 = dma.hbm_to_vmem [thread:$0]  %s230, 256, %s232, %s219, 128, 128, 8
        $region28: #{tpu_custom_call.1} parent=23 // pred_fallthru
          _
        // Predicated region
        $region29: #{tpu_custom_call.1} parent=23 // pred_check
          %p238 = pneg %p78
        $region30: #{tpu_custom_call.1} parent=23 // pred_check_branch
          %240 = sbr.rel (%p238) target = $region32
        $region31: #{tpu_custom_call.1} parent=23 // pred_region
          %p241 = scmp.lt.s32.totalorder %s25, 1
          %s242 = scalar_select %p241, %s25, 1
          %s243 = scalar_lea.vmem %s1, %s242
        $region32: #{tpu_custom_call.1} parent=23 // pred_fallthru
          _
        // Predicated region
        $region33: #{tpu_custom_call.1} parent=23 // pred_check
          %p244 = pneg %p104
        $region34: #{tpu_custom_call.1} parent=23 // pred_check_branch
          %246 = sbr.rel (%p244) target = $region36
        $region35: #{tpu_custom_call.1} parent=23 // pred_region
          %p247 = scmp.lt.s32.totalorder %s25, 1
          %s248 = scalar_select %p247, %s25, 1
          %s249 = scalar_lea.vmem %s2, %s248
        $region36: #{tpu_custom_call.1} parent=23 // pred_fallthru
          _
      $region24: #{tpu_custom_call.1} parent=5 // pred_fallthru
        _
      %p250 = scmp.le.s32.totalorder 1, %s18
      %p251 = scmp.lt.s32.totalorder %s18, 3
      %p252 = pnand %p250, %p251
      %p253 = pneg %p252
      // Predicated region
      $region37: #{tpu_custom_call.1} parent=5 // pred_check
        _
      $region38: #{tpu_custom_call.1} parent=5 // pred_check_branch
        %255 = sbr.rel (%p252) target = $region40
      $region39: #{tpu_custom_call.1} parent=5 // pred_region
        %s256 = ssub.s32 %s18, 1
        %s257 = sand.u32 %s45, 1
        %s258 = scalar_lea.sflag [#allocation3], %s257
        %s259 = sand.u32 %s45, 1
        %s260 = smul.addr %s259, 16
        %s261 = scalar_lea.vmem [#allocation2], %s260
        // Predicated region
        $region41: #{tpu_custom_call.1} parent=39 // pred_check
          %p262 = pneg %p58
        $region42: #{tpu_custom_call.1} parent=39 // pred_check_branch
          %264 = sbr.rel (%p262) target = $region44
        $region43: #{tpu_custom_call.1} parent=39 // pred_region
          %265 = dma.done %s258, 256
        $region44: #{tpu_custom_call.1} parent=39 // pred_fallthru
          _
        // Predicated region
        $region45: #{tpu_custom_call.1} parent=39 // pred_check
          %p266 = pneg %p131
        $region46: #{tpu_custom_call.1} parent=39 // pred_check_branch
          %268 = sbr.rel (%p266) target = $region48
        $region47: #{tpu_custom_call.1} parent=39 // pred_region
          %269 = dma.done [#allocation6], 6144
        $region48: #{tpu_custom_call.1} parent=39 // pred_fallthru
          _
        %s270 = sand.u32 %s45, 1
        %s271 = scalar_lea.sflag [#allocation3], %s270
        %s272 = sand.u32 %s45, 1
        %s273 = smul.addr %s272, 16
        %s274 = scalar_lea.vmem [#allocation2], %s273
        %p275 = pneg %p58
        %p276 = pneg %p55
        %p277 = scmp.lt.s32.totalorder %s27, 1
        %s278 = scalar_select %p277, %s27, 1
        %s279 = scalar_lea.vmem %s1, %s278
        %p280 = pneg %p84
        %p281 = pneg %p81
        %p282 = scmp.lt.s32.totalorder %s27, 1
        %s283 = scalar_select %p282, %s27, 1
        %s284 = scalar_lea.vmem %s2, %s283
        %p285 = pneg %p110
        %p286 = pneg %p107
        %p287 = pneg %p131
        %p288 = pneg %p128
        %p289 = pneg %p152
        %p290 = pneg %p149
        %p291 = pneg %p180
        %p292 = pneg %p177
        %s293 = sand.u32 %s167, 1
        %s294 = scalar_lea.sflag [#allocation4], %s293
        %s295 = sand.u32 %s167, 1
        %s296 = smul.addr %s295, 48
        %s297 = scalar_lea.vmem [#allocation7], %s296
        %s298 = smul.u32 2, %s28
        %p299 = scmp.lt.s32.totalorder %s27, 1
        %s300 = scalar_select %p299, %s27, 1
        %s301 = scalar_lea.vmem %s1, %s300
        %p302 = scmp.lt.s32.totalorder %s27, 1
        %s303 = scalar_select %p302, %s27, 1
        %s304 = scalar_lea.vmem %s2, %s303
        %s305 = smul.u32 2, %s28
        %v306 = vld [vmem:[%s261] sm:$0xff]
        %v307 = vld [vmem:[%s261 + $0x8] sm:$0xff]
        %308 = vadd.xlane.f32.xlu0 %v306
        %v309 = vpop.xlane.xlu0 %308
        %310 = vadd.xlane.f32.xlu0 %v307
        %v311 = vpop.xlane.xlu0 %310
        %v312 = vrcp.pop 128.0
        %v313 = vmul.f32 %v309, %v312
        %v314 = vmul.f32 %v311, %v312
        %v315 = vsub.f32 %v306, %v313
        %v316 = vsub.f32 %v307, %v314
        %v317 = vmul.f32 %v315, %v315
        %v318 = vmul.f32 %v316, %v316
        %319 = vadd.xlane.f32.xlu0 %v317
        %v320 = vpop.xlane.xlu0 %319
        %321 = vadd.xlane.f32.xlu0 %v318
        %v322 = vpop.xlane.xlu0 %321
        %v323 = vmul.f32 %v320, %v312
        %v324 = vmul.f32 %v322, %v312
        %v325 = vadd.f32 %v323, 1e-06
        %v326 = vadd.f32 %v324, 1e-06
        %v327 = vrsqrt.pop %v325
        %v328 = vrsqrt.pop %v326
        %v329 = vmul.f32 %v315, %v327
        %v330 = vmul.f32 %v316, %v328
        %v331 = vld [vmem:[%s301] sm:$0x1]
        %v332 = vld [vmem:[%s304] sm:$0x1]
        %v333 = vadd.f32 %v332, 1.0
        %v335 = vlaneseq
        %v336 = vshrl.u32 %v335, 7
        %v337 = vsub.s32 0, %v336
        %v338 = vrot.slane %v333, %v337
        %v340 = vmul.f32 %v329, %v338
        %v341 = vmul.f32 %v330, %v338
        %v343 = vlaneseq
        %v344 = vshrl.u32 %v343, 7
        %v345 = vsub.s32 0, %v344
        %v346 = vrot.slane %v331, %v345
        %v348 = vadd.f32 %v340, %v346
        %v349 = vadd.f32 %v341, %v346
        %v350 = vld [vmem:[#allocation5] sm:$0xff]
        %v351 = vld [vmem:[#allocation5 + $0x8] sm:$0xff]
        %v352 = vld [vmem:[#allocation5 + $0x10] sm:$0xff]
        %v353 = vld [vmem:[#allocation5 + $0x18] sm:$0xff]
        %v354 = vld [vmem:[#allocation5 + $0x20] sm:$0xff]
        %v355 = vld [vmem:[#allocation5 + $0x28] sm:$0xff]
        %v356 = vld [vmem:[#allocation5 + $0x30] sm:$0xff]
        %v357 = vld [vmem:[#allocation5 + $0x38] sm:$0xff]
        %v358 = vld [vmem:[#allocation5 + $0x40] sm:$0xff]
        %v359 = vld [vmem:[#allocation5 + $0x48] sm:$0xff]
        %v360 = vld [vmem:[#allocation5 + $0x50] sm:$0xff]
        %v361 = vld [vmem:[#allocation5 + $0x58] sm:$0xff]
        %v362 = vld [vmem:[#allocation5 + $0x60] sm:$0xff]
        %v363 = vld [vmem:[#allocation5 + $0x68] sm:$0xff]
        %v364 = vld [vmem:[#allocation5 + $0x70] sm:$0xff]
        %v365 = vld [vmem:[#allocation5 + $0x78] sm:$0xff]
        %v366 = vld [vmem:[#allocation5 + $0x80] sm:$0xff]
        %v367 = vld [vmem:[#allocation5 + $0x88] sm:$0xff]
        %v368 = vld [vmem:[#allocation5 + $0x90] sm:$0xff]
        %v369 = vld [vmem:[#allocation5 + $0x98] sm:$0xff]
        %v370 = vld [vmem:[#allocation5 + $0xa0] sm:$0xff]
        %v371 = vld [vmem:[#allocation5 + $0xa8] sm:$0xff]
        %v372 = vld [vmem:[#allocation5 + $0xb0] sm:$0xff]
        %v373 = vld [vmem:[#allocation5 + $0xb8] sm:$0xff]
        %v374 = vld [vmem:[#allocation5 + $0xc0] sm:$0xff]
        %v375 = vld [vmem:[#allocation5 + $0xc8] sm:$0xff]
        %v376 = vld [vmem:[#allocation5 + $0xd0] sm:$0xff]
        %v377 = vld [vmem:[#allocation5 + $0xd8] sm:$0xff]
        %v378 = vld [vmem:[#allocation5 + $0xe0] sm:$0xff]
        %v379 = vld [vmem:[#allocation5 + $0xe8] sm:$0xff]
        %v380 = vld [vmem:[#allocation5 + $0xf0] sm:$0xff]
        %v381 = vld [vmem:[#allocation5 + $0xf8] sm:$0xff]
        %v382 = vld [vmem:[#allocation5 + $0x100] sm:$0xff]
        %v383 = vld [vmem:[#allocation5 + $0x108] sm:$0xff]
        %v384 = vld [vmem:[#allocation5 + $0x110] sm:$0xff]
        %v385 = vld [vmem:[#allocation5 + $0x118] sm:$0xff]
        %v386 = vld [vmem:[#allocation5 + $0x120] sm:$0xff]
        %v387 = vld [vmem:[#allocation5 + $0x128] sm:$0xff]
        %v388 = vld [vmem:[#allocation5 + $0x130] sm:$0xff]
        %v389 = vld [vmem:[#allocation5 + $0x138] sm:$0xff]
        %v390 = vld [vmem:[#allocation5 + $0x140] sm:$0xff]
        %v391 = vld [vmem:[#allocation5 + $0x148] sm:$0xff]
        %v392 = vld [vmem:[#allocation5 + $0x150] sm:$0xff]
        %v393 = vld [vmem:[#allocation5 + $0x158] sm:$0xff]
        %v394 = vld [vmem:[#allocation5 + $0x160] sm:$0xff]
        %v395 = vld [vmem:[#allocation5 + $0x168] sm:$0xff]
        %v396 = vld [vmem:[#allocation5 + $0x170] sm:$0xff]
        %v397 = vld [vmem:[#allocation5 + $0x178] sm:$0xff]
        %v398 = vld [vmem:[%s4] sm:$0x7]
        %v400 = vlaneseq
        %v401 = vshrl.u32 %v400, 7
        %v402 = vsub.s32 0, %v401
        %v403 = vrot.slane %v398, %v402
        %v404 = vlaneseq
        %v405 = vshrl.u32 %v404, 7
        %v406 = vsub.s32 1, %v405
        %v407 = vrot.slane %v398, %v406
        %v408 = vlaneseq
        %v409 = vshrl.u32 %v408, 7
        %v410 = vsub.s32 2, %v409
        %v411 = vrot.slane %v398, %v410
        %415 = vmatprep.subr.mxu0 %v351
        %416 = vmatpush1.msra.mxu0 %v350
        %417 = vmatprep.subr.mxu0 %v354
        %418 = vmatpush1.msra.mxu0 %v353
        %419 = vmatprep.subr.mxu0 %v357
        %420 = vmatpush1.msra.mxu0 %v356
        %421 = vmatprep.subr.mxu0 %v360
        %422 = vmatpush1.msra.mxu0 %v359
        %423 = vmatprep.subr.mxu0 %v363
        %424 = vmatpush1.msra.mxu0 %v362
        %425 = vmatprep.subr.mxu0 %v366
        %426 = vmatpush1.msra.mxu0 %v365
        %427 = vmatprep.subr.mxu0 %v369
        %428 = vmatpush1.msra.mxu0 %v368
        %429 = vmatprep.subr.mxu0 %v372
        %430 = vmatpush1.msra.mxu0 %v371
        %431 = vmatprep.subr.mxu0 %v375
        %432 = vmatpush1.msra.mxu0 %v374
        %433 = vmatprep.subr.mxu0 %v378
        %434 = vmatpush1.msra.mxu0 %v377
        %435 = vmatprep.subr.mxu0 %v381
        %436 = vmatpush1.msra.mxu0 %v380
        %437 = vmatprep.subr.mxu0 %v384
        %438 = vmatpush1.msra.mxu0 %v383
        %439 = vmatprep.subr.mxu0 %v387
        %440 = vmatpush1.msra.mxu0 %v386
        %441 = vmatprep.subr.mxu0 %v390
        %442 = vmatpush1.msra.mxu0 %v389
        %443 = vmatprep.subr.mxu0 %v393
        %444 = vmatpush1.msra.mxu0 %v392
        %445 = vmatprep.subr.mxu0 %v396
        %446 = vmatpush1.msra.mxu0 %v395
        %447 = vmatprep.subr.mxu0 0.0
        %448 = vmatpush1.msra.mxu0 0.0
        %449 = vmatprep.subr.mxu0 0.0
        %450 = vmatpush1.msra.mxu0 0.0
        %451 = vmatprep.subr.mxu0 0.0
        %452 = vmatpush1.msra.mxu0 0.0
        %453 = vmatprep.subr.mxu0 0.0
        %454 = vmatpush1.msra.mxu0 0.0
        %455 = vmatprep.subr.mxu0 0.0
        %456 = vmatpush1.msra.mxu0 0.0
        %457 = vmatprep.subr.mxu0 0.0
        %458 = vmatpush1.msra.mxu0 0.0
        %459 = vmatprep.subr.mxu0 0.0
        %460 = vmatpush1.msra.mxu0 0.0
        %461 = vmatprep.subr.mxu0 0.0
        %462 = vmatpush1.msra.mxu0 0.0
        %463 = vmatprep.subr.mxu0 0.0
        %464 = vmatpush1.msra.mxu0 0.0
        %465 = vmatprep.subr.mxu0 0.0
        %466 = vmatpush1.msra.mxu0 0.0
        %467 = vmatprep.subr.mxu0 0.0
        %468 = vmatpush1.msra.mxu0 0.0
        %469 = vmatprep.subr.mxu0 0.0
        %470 = vmatpush1.msra.mxu0 0.0
        %471 = vmatprep.subr.mxu0 0.0
        %472 = vmatpush1.msra.mxu0 0.0
        %473 = vmatprep.subr.mxu0 0.0
        %474 = vmatpush1.msra.mxu0 0.0
        %475 = vmatprep.subr.mxu0 0.0
        %476 = vmatpush1.msra.mxu0 0.0
        %477 = vmatprep.subr.mxu0 0.0
        %478 = vmatpush1.msra.mxu0 0.0
        %479 = vmatprep.mubr.f32.mxu0 0.0
        %480 = vmatmul.mubr.f32.gmra.mrb[0].mxu0 %v348
        %v481 = vpop.f32.mrb[0].mxu0
        %v482 = vadd.f32 %v403, %v481
        %v483 = vpop.f32.mrb[0].mxu0
        %v484 = vadd.f32 %v407, %v483
        %485 = vmatprep.mubr.f32.mxu0 0.0
        %486 = vmatmul.mubr.f32.gmra.mrb[0].mxu0 %v349
        %v487 = vpop.f32.mrb[0].mxu0
        %v488 = vadd.f32 %v403, %v487
        %v489 = vpop.f32.mrb[0].mxu0
        %v490 = vadd.f32 %v407, %v489
        %491 = vdwg.mxu0
        %492 = vmatprep.subr.mxu0 0.0
        %493 = vmatpush1.msra.mxu0 %v352
        %494 = vmatprep.subr.mxu0 0.0
        %495 = vmatpush1.msra.mxu0 %v355
        %496 = vmatprep.subr.mxu0 0.0
        %497 = vmatpush1.msra.mxu0 %v358
        %498 = vmatprep.subr.mxu0 0.0
        %499 = vmatpush1.msra.mxu0 %v361
        %500 = vmatprep.subr.mxu0 0.0
        %501 = vmatpush1.msra.mxu0 %v364
        %502 = vmatprep.subr.mxu0 0.0
        %503 = vmatpush1.msra.mxu0 %v367
        %504 = vmatprep.subr.mxu0 0.0
        %505 = vmatpush1.msra.mxu0 %v370
        %506 = vmatprep.subr.mxu0 0.0
        %507 = vmatpush1.msra.mxu0 %v373
        %508 = vmatprep.subr.mxu0 0.0
        %509 = vmatpush1.msra.mxu0 %v376
        %510 = vmatprep.subr.mxu0 0.0
        %511 = vmatpush1.msra.mxu0 %v379
        %512 = vmatprep.subr.mxu0 0.0
        %513 = vmatpush1.msra.mxu0 %v382
        %514 = vmatprep.subr.mxu0 0.0
        %515 = vmatpush1.msra.mxu0 %v385
        %516 = vmatprep.subr.mxu0 0.0
        %517 = vmatpush1.msra.mxu0 %v388
        %518 = vmatprep.subr.mxu0 0.0
        %519 = vmatpush1.msra.mxu0 %v391
        %520 = vmatprep.subr.mxu0 0.0
        %521 = vmatpush1.msra.mxu0 %v394
        %522 = vmatprep.subr.mxu0 0.0
        %523 = vmatpush1.msra.mxu0 %v397
        %524 = vmatprep.subr.mxu0 0.0
        %525 = vmatpush1.msra.mxu0 0.0
        %526 = vmatprep.subr.mxu0 0.0
        %527 = vmatpush1.msra.mxu0 0.0
        %528 = vmatprep.subr.mxu0 0.0
        %529 = vmatpush1.msra.mxu0 0.0
        %530 = vmatprep.subr.mxu0 0.0
        %531 = vmatpush1.msra.mxu0 0.0
        %532 = vmatprep.subr.mxu0 0.0
        %533 = vmatpush1.msra.mxu0 0.0
        %534 = vmatprep.subr.mxu0 0.0
        %535 = vmatpush1.msra.mxu0 0.0
        %536 = vmatprep.subr.mxu0 0.0
        %537 = vmatpush1.msra.mxu0 0.0
        %538 = vmatprep.subr.mxu0 0.0
        %539 = vmatpush1.msra.mxu0 0.0
        %540 = vmatprep.subr.mxu0 0.0
        %541 = vmatpush1.msra.mxu0 0.0
        %542 = vmatprep.subr.mxu0 0.0
        %543 = vmatpush1.msra.mxu0 0.0
        %544 = vmatprep.subr.mxu0 0.0
        %545 = vmatpush1.msra.mxu0 0.0
        %546 = vmatprep.subr.mxu0 0.0
        %547 = vmatpush1.msra.mxu0 0.0
        %548 = vmatprep.subr.mxu0 0.0
        %549 = vmatpush1.msra.mxu0 0.0
        %550 = vmatprep.subr.mxu0 0.0
        %551 = vmatpush1.msra.mxu0 0.0
        %552 = vmatprep.subr.mxu0 0.0
        %553 = vmatpush1.msra.mxu0 0.0
        %554 = vmatprep.subr.mxu0 0.0
        %555 = vmatpush1.msra.mxu0 0.0
        %556 = vmatprep.mubr.f32.mxu0 0.0
        %557 = vmatmul.mubr.f32.gmra.mrb[0].mxu0 %v348
        %v558 = vpop.f32.mrb[0].mxu0
        %v559 = vadd.f32 %v411, %v558
        %v560 = vpop.f32.mrb[0].mxu0
        %561 = vmatprep.mubr.f32.mxu0 0.0
        %562 = vmatmul.mubr.f32.gmra.mrb[0].mxu0 %v349
        %v563 = vpop.f32.mrb[0].mxu0
        %v564 = vadd.f32 %v411, %v563
        %v565 = vpop.f32.mrb[0].mxu0
        %566 = vdwg.mxu0
        %567 = vst [vmem:[%s297] sm:$0xff] %v482
        %568 = vst [vmem:[%s297 + $0x8] sm:$0xff] %v484
        %569 = vst [vmem:[%s297 + $0x10] sm:$0xff] %v559
        %570 = vst [vmem:[%s297 + $0x18] sm:$0xff] %v488
        %571 = vst [vmem:[%s297 + $0x20] sm:$0xff] %v490
        %572 = vst [vmem:[%s297 + $0x28] sm:$0xff] %v564
        %s573 = sand.u32 %s167, 1
        %s574 = scalar_lea.sflag [#allocation4], %s573
        %s575 = sand.u32 %s167, 1
        %s576 = smul.addr %s575, 48
        %s577 = scalar_lea.vmem [#allocation7], %s576
        // Predicated region
        $region49: #{tpu_custom_call.1} parent=39 // pred_check
          %p578 = pneg %p177
        $region50: #{tpu_custom_call.1} parent=39 // pred_check_branch
          %580 = sbr.rel (%p578) target = $region52
        $region51: #{tpu_custom_call.1} parent=39 // pred_region
          %s581 = smul.u32 2, %s28
          %s583 = ssub.s32 768, 768
          %584 = vsyncadd %s574, %s583
          %s585 = smul.addr %s581, 3
          %s586 = smul.addr %s27, 6
          %s587 = sadd.s32 %s585, %s586
          %s588 = smul.addr %s587, 128
          %s589 = scalar_lea.hbm %s5, %s588
          %s590 = sshll.u32 %s577, 4
          %s591 = int_to_ptr.vmem [resolvable:$true] %s590
          %596 = dma.vmem_to_hbm [thread:$0]  %s591, 768, %s589, %s574, 384, 384, 24
        $region52: #{tpu_custom_call.1} parent=39 // pred_fallthru
          _
      $region40: #{tpu_custom_call.1} parent=5 // pred_fallthru
        _
      %p597 = scmp.le.s32.totalorder 2, %s18
      // Predicated region
      $region53: #{tpu_custom_call.1} parent=5 // pred_check
        %p598 = pneg %p597
      $region54: #{tpu_custom_call.1} parent=5 // pred_check_branch
        %600 = sbr.rel (%p598) target = $region56
      $region55: #{tpu_custom_call.1} parent=5 // pred_region
        %s601 = ssub.s32 %s18, 2
        // Predicated region
        $region57: #{tpu_custom_call.1} parent=55 // pred_check
          %p602 = pneg %p183
        $region58: #{tpu_custom_call.1} parent=55 // pred_check_branch
          %604 = sbr.rel (%p602) target = $region60
        $region59: #{tpu_custom_call.1} parent=55 // pred_region
          %s605 = sand.u32 %s168, 1
          %s606 = scalar_lea.sflag [#allocation4], %s605
          %s607 = sand.u32 %s168, 1
          %s608 = smul.addr %s607, 48
          %s609 = scalar_lea.vmem [#allocation7], %s608
          %610 = dma.done %s606, 768
        $region60: #{tpu_custom_call.1} parent=55 // pred_fallthru
          _
      $region56: #{tpu_custom_call.1} parent=5 // pred_fallthru
        _
    $region6: #{tpu_custom_call.1} parent=1 // loop_footer
      %s22 = sadd.s32 1, %s18
    $region7: #{tpu_custom_call.1} parent=1 // loop_footer_branch
      %17 = sbr.rel target = $region3
    $region8: #{tpu_custom_call.1} parent=1 // loop_exit
      _
    %611 = vsyncpa [#allocation3], 1
    %s612 = scalar_lea.sflag [#allocation3], 1
    %613 = vsyncpa %s612, 1
    %614 = vsyncpa [#allocation6], 1
    %615 = vsyncpa [#allocation4], 1
    %s616 = scalar_lea.sflag [#allocation4], 1
    %617 = vsyncpa %s616, 1

</llo_original>
